<compile_context>
chip_gen: v6e
topology: v6e:2x2x1
jax: 0.10.0
libtpu: 0.0.40
codegen_flags: <defaults>
</compile_context>

<pallas_src>
import jax
import jax.numpy as jnp
from jax.experimental import pallas as pl
from jax.experimental.pallas import tpu as pltpu

_LANE = 128
_SUBLANE = 8
_VMEM_BUDGET_BYTES = 12 * 1024 * 1024  # reg+out double-buffers kept under v5e's 16 MiB scoped default


def _round_up(x, m):
    return ((x + m - 1) // m) * m


def _anchor_point_transform_kernel(anchors_ref, strides_ref, reg_ref, out_ref):
    # anchors_ref / strides_ref: (1, ta) or (R, ta) -- interleaved constants
    # reg_ref / out_ref:         (tb, ta)
    out_ref[...] = anchors_ref[...] + reg_ref[...] * strides_ref[...]


def _anchor_point_transform_impl(all_anchors, regression_outputs, strides_for_all_anchors,
                                 *, tile_lanes=8192):
    """Pallas TPU implementation of AnchorPointTransform.forward.

    all_anchors:             (A,)
    regression_outputs:      (B, A, 2)
    strides_for_all_anchors: (A,)
    returns:                 (B, A, 2)
    """
    B, A, two = regression_outputs.shape
    assert two == 2
    assert all_anchors.shape == (A,)
    assert strides_for_all_anchors.shape == (A,)
    assert tile_lanes >= _LANE

    # Keep the dominant (B, A, 2) tensor in its own dtype (no silent bf16 -> f32
    # promotion / extra HBM copy); cast only the O(A) constants.
    dtype = regression_outputs.dtype
    W = 2 * A

    # ---- O(A) precompute (batch independent) ----
    anchors_rep = jnp.repeat(all_anchors.astype(dtype), 2)                       # (2A,)
    strides_signed = jnp.stack(
        (-strides_for_all_anchors, strides_for_all_anchors), axis=-1
    ).astype(dtype).reshape(-1)                                                   # (2A,)

    # ---- fold lanes into sublanes when B < 8 so every (8,128) vreg is fully used ----
    k = 1
    if B < _SUBLANE:
        for cand in (8, 4, 2):
            if cand <= _SUBLANE // B and W % cand == 0:
                k = cand
                break
    R = B * k
    W_eff = W // k
    reg_flat = regression_outputs.reshape(R, W_eff)                               # free row-major reshape

    if k > 1:
        # Pre-tile the constants to the folded row layout (still only B*W <= 8*W elems).
        anchors_c = jnp.tile(anchors_rep.reshape(k, W_eff), (B, 1))               # (R, W_eff), R <= 8
        strides_c = jnp.tile(strides_signed.reshape(k, W_eff), (B, 1))
        rows_c = R
    else:
        anchors_c = anchors_rep.reshape(1, W_eff)
        strides_c = strides_signed.reshape(1, W_eff)
        rows_c = 1

    # ---- lane tile: large, cdiv-clipped (no full-tensor pad and no output slice) ----
    ta = min(_round_up(W_eff, _LANE), tile_lanes)
    if W_eff >= 2 * _SUBLANE * _LANE:
        # v7x megacore: give the "parallel" lane axis at least 2 grid steps.
        ta = min(ta, _round_up(pl.cdiv(W_eff, 2), _LANE))
    if ta >= W_eff:
        ta = W_eff                                                                # single full-width block
    num_lane_tiles = pl.cdiv(W_eff, ta)

    # ---- batch tile (innermost) budgeted so double-buffered reg+out fit VMEM ----
    itemsize = jnp.dtype(dtype).itemsize
    max_tb = max(_SUBLANE,
                 (_VMEM_BUDGET_BYTES // (4 * ta * itemsize)) // _SUBLANE * _SUBLANE)
    tb = R if R <= max_tb else max_tb
    num_batch_tiles = pl.cdiv(R, tb)

    out_flat = pl.pallas_call(
        _anchor_point_transform_kernel,
        out_shape=jax.ShapeDtypeStruct((R, W_eff), dtype),
        grid_spec=pltpu.PrefetchScalarGridSpec(
            num_scalar_prefetch=0,
            # Batch innermost: the anchor/stride constant blocks stay VMEM-resident
            # across batch steps (their index_map is independent of b).
            grid=(num_lane_tiles, num_batch_tiles),
            in_specs=[
                pl.BlockSpec((rows_c, ta), lambda j, b: (0, j)),   # interleaved anchors
                pl.BlockSpec((rows_c, ta), lambda j, b: (0, j)),   # signed strides
                pl.BlockSpec((tb, ta), lambda j, b: (b, j)),       # regressions
            ],
            out_specs=pl.BlockSpec((tb, ta), lambda j, b: (b, j)),
        ),
        compiler_params=pltpu.CompilerParams(
            dimension_semantics=("parallel", "parallel")),
    )(anchors_c, strides_c, reg_flat)

    return out_flat.reshape(B, A, 2)


# Jit the wrapper so the O(A) prep ops (repeat/stack/negate/tile) fuse instead of
# launching several tiny XLA kernels per call.
anchor_point_transform = jax.jit(_anchor_point_transform_impl,
                                 static_argnames=("tile_lanes",))


def _reference(all_anchors, regression_outputs, strides_for_all_anchors):
    x1 = all_anchors[None] - regression_outputs[:, :, 0] * strides_for_all_anchors[None]
    x2 = all_anchors[None] + regression_outputs[:, :, 1] * strides_for_all_anchors[None]
    return jnp.stack((x1, x2), axis=2)


if __name__ == "__main__":
    key = jax.random.PRNGKey(0)
    B, A = 2, 256   # small shapes consistent with the module

    k1, _, _ = jax.random.split(key, 3)
    all_anchors = jnp.arange(A, dtype=jnp.float32) * 8.0 + 4.0   # anchor centers
    strides = jnp.full((A,), 8.0, dtype=jnp.float32)             # per-anchor stride
    regression_outputs = jax.random.uniform(k1, (B, A, 2), dtype=jnp.float32) * 4.0

    out = anchor_point_transform(all_anchors, regression_outputs, strides)
    out = jax.block_until_ready(out)

    ref = _reference(all_anchors, regression_outputs, strides)
    assert out.shape == (B, A, 2)
    assert jnp.allclose(out, ref, atol=1e-6, rtol=1e-6)

    print("KERNEL_OK")
</pallas_src>

<mosaic_0001>
module attributes {stable_mosaic.version = 11 : i64} {
  func.func @_anchor_point_transform_kernel(%arg0: i32, %arg1: i32, %arg2: memref<8x128xf32, #tpu.memory_space<vmem>>, %arg3: memref<8x128xf32, #tpu.memory_space<vmem>>, %arg4: memref<8x128xf32, #tpu.memory_space<vmem>>, %arg5: memref<8x128xf32, #tpu.memory_space<vmem>>) attributes {dimension_semantics = [#tpu.dimension_semantics<parallel>, #tpu.dimension_semantics<parallel>], iteration_bounds = array<i64: 1, 1>, scalar_prefetch = 0 : i64, scratch_operands = 0 : i64, tpu.core_type = #tpu.core_type<tc>, window_params = [{transform_indices = @transform_0, window_bounds = array<i64: 8, 128>}, {transform_indices = @transform_1, window_bounds = array<i64: 8, 128>}, {transform_indices = @transform_2, window_bounds = array<i64: 8, 128>}, {transform_indices = @transform_3, window_bounds = array<i64: 8, 128>}]} {
    %c0 = arith.constant 0 : index
    %c0_0 = arith.constant 0 : index
    %0 = vector.load %arg2[%c0, %c0_0] : memref<8x128xf32, #tpu.memory_space<vmem>>, vector<8x128xf32>
    %c0_1 = arith.constant 0 : index
    %c0_2 = arith.constant 0 : index
    %1 = vector.load %arg4[%c0_1, %c0_2] : memref<8x128xf32, #tpu.memory_space<vmem>>, vector<8x128xf32>
    %c0_3 = arith.constant 0 : index
    %c0_4 = arith.constant 0 : index
    %2 = vector.load %arg3[%c0_3, %c0_4] : memref<8x128xf32, #tpu.memory_space<vmem>>, vector<8x128xf32>
    %3 = arith.mulf %1, %2 : vector<8x128xf32>
    %4 = arith.addf %0, %3 : vector<8x128xf32>
    %c0_5 = arith.constant 0 : index
    %c0_6 = arith.constant 0 : index
    %5 = vector.load %arg5[%c0_5, %c0_6] : memref<8x128xf32, #tpu.memory_space<vmem>>, vector<8x128xf32>
    tpu.vector_store %arg5[%c0_5, %c0_6], %4 {strides = array<i32>} : memref<8x128xf32, #tpu.memory_space<vmem>>, vector<8x128xf32>,
    return
  }
  func.func @transform_0(%arg0: i32, %arg1: i32) -> (i32, i32) {
    %c0_i32 = arith.constant 0 : i32
    %c0_i32_0 = arith.constant 0 : i32
    return %c0_i32, %arg0 : i32, i32
  }
  func.func @transform_1(%arg0: i32, %arg1: i32) -> (i32, i32) {
    %c0_i32 = arith.constant 0 : i32
    %c0_i32_0 = arith.constant 0 : i32
    return %c0_i32, %arg0 : i32, i32
  }
  func.func @transform_2(%arg0: i32, %arg1: i32) -> (i32, i32) {
    %c0_i32 = arith.constant 0 : i32
    return %arg1, %arg0 : i32, i32
  }
  func.func @transform_3(%arg0: i32, %arg1: i32) -> (i32, i32) {
    %c0_i32 = arith.constant 0 : i32
    return %arg1, %arg0 : i32, i32
  }
}

</mosaic_0001>

<llo_original>
// kernel: neg.1
$region0: #{neg.1}
  #allocation0 [shape = 's32[1]{0}', space=sflag, size = 0x4, scoped, tag = 'scoped memory for neg.1']
  %s0 = inlined_call_operand.vmem [shape: f32[256], index: 0, kind: input, shape index: {}]
  %s1 = inlined_call_operand.vmem [shape: f32[256], index: 1, kind: output, shape index: {}]
  %v2 = vld [vmem:[%s0] sm:$0x3]
  %3 = xla_tuple %v2
  %4 = xla_tuple %3
  %v5 = vxor.u32 %v2, 2147483648
  %6 = xla_tuple %v5
  %7 = vst [vmem:[%s1] sm:$0x3] %v5

// kernel: _anchor_point_transform_impl.1
$region0: #{_anchor_point_transform_impl.1}
  #allocation0 [shape = 'u32[]', space=smem, size = 0x4, offset = 0x4, fixed_abs, tag = 'smem constant byte address 0x4 - core index']
  #allocation1 [shape = 'u32[144,128]{1,0:T(1,128)}', space=vmem, size = 0x12000, scoped, tag = 'internal scratch']
  %s0 = inlined_call_operand.vmem [shape: f32[8,128], index: 0, kind: input, shape index: {}]
  %s1 = inlined_call_operand.vmem [shape: f32[8,128], index: 1, kind: input, shape index: {}]
  %s2 = inlined_call_operand.vmem [shape: f32[8,128], index: 2, kind: input, shape index: {}]
  %s3 = inlined_call_operand.vmem [shape: f32[8,128], index: 3, kind: output, shape index: {}]
  %s4 = sld [smem:[#allocation0]]
  $region22: #{_anchor_point_transform_impl.1} parent=0
    _
  %s6 = ssub.s32 1, %s4
  %s7 = scalar_select 0, %s6, %s4
  // Predicated region
  $region2: #{_anchor_point_transform_impl.1} parent=0 // pred_check
    _
  $region3: #{_anchor_point_transform_impl.1} parent=0 // pred_check_branch
    %9 = sbr.rel (0) target = $region5
  $region4: #{_anchor_point_transform_impl.1} parent=0 // pred_region
    _
  $region5: #{_anchor_point_transform_impl.1} parent=0 // pred_fallthru
    _
  // Predicated region
  $region6: #{_anchor_point_transform_impl.1} parent=0 // pred_check
    _
  $region7: #{_anchor_point_transform_impl.1} parent=0 // pred_check_branch
    %11 = sbr.rel (0) target = $region9
  $region8: #{_anchor_point_transform_impl.1} parent=0 // pred_region
    _
  $region9: #{_anchor_point_transform_impl.1} parent=0 // pred_fallthru
    _
  // Predicated region
  $region10: #{_anchor_point_transform_impl.1} parent=0 // pred_check
    _
  $region11: #{_anchor_point_transform_impl.1} parent=0 // pred_check_branch
    %13 = sbr.rel (0) target = $region13
  $region12: #{_anchor_point_transform_impl.1} parent=0 // pred_region
    _
  $region13: #{_anchor_point_transform_impl.1} parent=0 // pred_fallthru
    _
  %v14 = vld [vmem:[%s0] sm:$0xff]
  %v15 = vld [vmem:[%s2] sm:$0xff]
  %v16 = vld [vmem:[%s1] sm:$0xff]
  %v17 = vmul.f32 %v15, %v16
  %v18 = vadd.f32 %v14, %v17
  %19 = vst [vmem:[%s3] sm:$0xff] %v18
  // Predicated region
  $region14: #{_anchor_point_transform_impl.1} parent=0 // pred_check
    _
  $region15: #{_anchor_point_transform_impl.1} parent=0 // pred_check_branch
    %21 = sbr.rel (0) target = $region17
  $region16: #{_anchor_point_transform_impl.1} parent=0 // pred_region
    _
  $region17: #{_anchor_point_transform_impl.1} parent=0 // pred_fallthru
    _
  // Predicated region
  $region18: #{_anchor_point_transform_impl.1} parent=0 // pred_check
    _
  $region19: #{_anchor_point_transform_impl.1} parent=0 // pred_check_branch
    %23 = sbr.rel (0) target = $region21
  $region20: #{_anchor_point_transform_impl.1} parent=0 // pred_region
    _
  $region21: #{_anchor_point_transform_impl.1} parent=0 // pred_fallthru
    _

</llo_original>
